<compile_context>
chip_gen: v7x
topology: tpu7x:2x2x1
jax: 0.10.0
libtpu: 0.0.40
codegen_flags: <defaults>
</compile_context>

<pallas_src>
import jax
import jax.numpy as jnp
from jax.experimental import pallas as pl
from jax.experimental.pallas import tpu as pltpu

LATENT_DIM = 3
NUM_EMBEDDINGS = 100


def _vq_kernel(zt_ref, es_ref, e2_ref, idx_ref):
    # zt_ref : (D, TILE_N)   f32   z tile, N on lanes
    # es_ref : (K_PAD, D)    f32   -2 * codebook, K on sublanes (K_PAD = ceil(K/8)*8)
    # e2_ref : (K_PAD, 1)    f32   ||E_k||^2 (+1e30 on padded rows -> never win)
    # idx_ref: (1, TILE_N)   int32 argmin index per column
    zt = zt_ref[...]
    d, tile_n = zt.shape
    k_pad = es_ref.shape[0]
    n_chunks = k_pad // 8

    def chunk_dist(c):
        # dist[s, n] = ||E_{c*8+s}||^2 - 2 * sum_d E[c*8+s, d] * z_t[d, n]
        es = es_ref[c * 8:(c + 1) * 8, :]          # (8, D)   (-2 already folded in)
        e2 = e2_ref[c * 8:(c + 1) * 8, :]          # (8, 1)
        dist = es[:, 0:1] * zt[0:1, :]             # (8, TILE_N)
        for dd in range(1, d):
            dist = dist + es[:, dd:dd + 1] * zt[dd:dd + 1, :]
        return dist + e2

    # Fused distance + running argmin over K, 8 sublane-rows at a time.
    best_val = chunk_dist(0)                                   # (8, TILE_N)
    best_chunk = jnp.zeros((8, tile_n), jnp.int32)
    for c in range(1, n_chunks):
        dist = chunk_dist(c)
        better = dist < best_val                               # strict: earlier chunk wins ties
        best_val = jnp.where(better, dist, best_val)
        best_chunk = jnp.where(better, jnp.int32(c), best_chunk)

    # Final reduce across the 8 sublane tracks, first-index-wins tie-breaking.
    row = jax.lax.broadcasted_iota(jnp.int32, (8, tile_n), 0)
    cand_idx = best_chunk * 8 + row                            # real codebook index per track
    min_val = jnp.min(best_val, axis=0, keepdims=True)         # (1, TILE_N)
    masked = jnp.where(best_val == min_val, cand_idx, jnp.int32(k_pad))
    idx_ref[...] = jnp.min(masked, axis=0, keepdims=True)


def vector_quantizer_forward(z_e, embedding_weight, *, tile_n=4096):
    """z_e: (..., latent_dim); embedding_weight: (K, latent_dim).
    Returns indices with shape z_e.shape[:-1], dtype int32."""
    lead_shape = z_e.shape[:-1]
    d = z_e.shape[-1]
    k = embedding_weight.shape[0]

    z_flat = z_e.reshape(-1, d).astype(jnp.float32)
    n = z_flat.shape[0]

    # --- lane-dense layout: N on the 128-wide lane axis ---
    n_pad128 = max(((n + 127) // 128) * 128, 128)

    # Tile selection:
    #   * large tiles amortize per-grid-step overhead,
    #   * keep >= 2 grid steps when N allows (v7x: "parallel" axis -> 2 TensorCores),
    #   * rebalance the tile so N-padding waste stays < 128 columns.
    tile_req = max(128, (tile_n // 128) * 128)
    tile0 = min(tile_req, n_pad128)
    grid_n = pl.cdiv(n_pad128, tile0)
    if grid_n == 1 and n_pad128 >= 256:
        grid_n = 2
    tile = ((pl.cdiv(n_pad128, grid_n) + 127) // 128) * 128
    grid_n = pl.cdiv(n_pad128, tile)
    n_pad = grid_n * tile

    # TODO(synk): ideally the producer emits z already laid out as (D, N); this
    # transpose+pad is one extra HBM round-trip outside the kernel's pipeline.
    zt = jnp.zeros((d, n_pad), jnp.float32).at[:, :n].set(z_flat.T)

    # Codebook on sublanes, padded to a multiple of 8 (104 for K=100), -2 scale
    # folded in; ||E||^2 hoisted here with a 1e30 sentinel on padded rows.
    k_pad = ((k + 7) // 8) * 8
    e = embedding_weight.astype(jnp.float32)
    e_scaled_pad = jnp.zeros((k_pad, d), jnp.float32).at[:k, :].set(-2.0 * e)
    e2 = jnp.sum(e * e, axis=1)
    e2_pad = jnp.full((k_pad, 1), 1e30, jnp.float32).at[:k, 0].set(e2)

    idx = pl.pallas_call(
        _vq_kernel,
        out_shape=jax.ShapeDtypeStruct((1, n_pad), jnp.int32),
        grid_spec=pltpu.PrefetchScalarGridSpec(
            num_scalar_prefetch=0,
            grid=(grid_n,),
            in_specs=[
                pl.BlockSpec((d, tile), lambda i: (0, i)),       # z tile (pipelined)
                pl.BlockSpec((k_pad, d), lambda i: (0, 0)),      # -2*codebook (resident)
                pl.BlockSpec((k_pad, 1), lambda i: (0, 0)),      # ||E||^2 (resident)
            ],
            out_specs=pl.BlockSpec((1, tile), lambda i: (0, i)),
        ),
        compiler_params=pltpu.CompilerParams(
            dimension_semantics=("parallel",),
        ),
    )(zt, e_scaled_pad, e2_pad)

    return idx[0, :n].reshape(lead_shape)


def init_vq_params(key, num_embeddings=NUM_EMBEDDINGS, latent_dim=LATENT_DIM):
    # Matches nn.Embedding weight init in the module: uniform(-1/K, 1/K), (K, D).
    lim = 1.0 / num_embeddings
    return jax.random.uniform(
        key, (num_embeddings, latent_dim), jnp.float32, minval=-lim, maxval=lim
    )


def _reference_indices(z_e, embedding_weight):
    dist = (
        jnp.sum(z_e ** 2, axis=-1, keepdims=True)
        + jnp.sum(embedding_weight ** 2, axis=1)
        - 2.0 * jnp.matmul(z_e, embedding_weight.T)
    )
    return jnp.argmin(dist, axis=-1).astype(jnp.int32)


if __name__ == "__main__":
    key = jax.random.PRNGKey(0)
    k_emb, k_z1, k_z2 = jax.random.split(key, 3)

    embedding_weight = init_vq_params(k_emb)

    # Small input consistent with the module: batch=2, seq=8, latent_dim=3.
    z_small = jax.random.normal(k_z1, (2, 8, LATENT_DIM), jnp.float32)
    idx_small = jax.block_until_ready(
        vector_quantizer_forward(z_small, embedding_weight)
    )
    assert idx_small.shape == z_small.shape[:-1]
    assert bool(jnp.all(idx_small == _reference_indices(z_small, embedding_weight)))

    # Slightly larger input to exercise the multi-step "parallel" grid path.
    z_med = jax.random.normal(k_z2, (4, 300, LATENT_DIM), jnp.float32)
    idx_med = jax.block_until_ready(
        vector_quantizer_forward(z_med, embedding_weight)
    )
    assert idx_med.shape == z_med.shape[:-1]
    assert bool(jnp.all(idx_med == _reference_indices(z_med, embedding_weight)))

    print("KERNEL_OK")
</pallas_src>

<mosaic_0001>
module attributes {stable_mosaic.version = 11 : i64} {
  func.func @_vq_kernel(%arg0: i32, %arg1: memref<3x128xf32, #tpu.memory_space<vmem>>, %arg2: memref<104x3xf32, #tpu.memory_space<vmem>>, %arg3: memref<104x1xf32, #tpu.memory_space<vmem>>, %arg4: memref<1x128xi32, #tpu.memory_space<vmem>>) attributes {dimension_semantics = [#tpu.dimension_semantics<parallel>], iteration_bounds = array<i64: 1>, scalar_prefetch = 0 : i64, scratch_operands = 0 : i64, tpu.core_type = #tpu.core_type<tc>, window_params = [{transform_indices = @transform_0, window_bounds = array<i64: 3, 128>}, {pipeline_mode = #tpu.pipeline_mode<synchronous>, transform_indices = @transform_1, window_bounds = array<i64: 104, 3>}, {pipeline_mode = #tpu.pipeline_mode<synchronous>, transform_indices = @transform_2, window_bounds = array<i64: 104, 1>}, {transform_indices = @transform_3, window_bounds = array<i64: 1, 128>}]} {
    %c0 = arith.constant 0 : index
    %c0_0 = arith.constant 0 : index
    %0 = vector.load %arg1[%c0, %c0_0] : memref<3x128xf32, #tpu.memory_space<vmem>>, vector<3x128xf32>
    %c0_1 = arith.constant 0 : index
    %c0_2 = arith.constant 0 : index
    %1 = vector.load %arg2[%c0_1, %c0_2] : memref<104x3xf32, #tpu.memory_space<vmem>>, vector<8x3xf32>
    %c0_3 = arith.constant 0 : index
    %c0_4 = arith.constant 0 : index
    %2 = vector.load %arg3[%c0_3, %c0_4] : memref<104x1xf32, #tpu.memory_space<vmem>>, vector<8x1xf32>
    %3 = vector.extract_strided_slice %1 {offsets = [0, 0], sizes = [8, 1], strides = [1, 1]} : vector<8x3xf32> to vector<8x1xf32>
    %4 = vector.extract_strided_slice %0 {offsets = [0, 0], sizes = [1, 128], strides = [1, 1]} : vector<3x128xf32> to vector<1x128xf32>
    %5 = vector.broadcast %3 : vector<8x1xf32> to vector<8x128xf32>
    %6 = vector.broadcast %4 : vector<1x128xf32> to vector<8x128xf32>
    %7 = arith.mulf %5, %6 : vector<8x128xf32>
    %8 = vector.extract_strided_slice %1 {offsets = [0, 1], sizes = [8, 1], strides = [1, 1]} : vector<8x3xf32> to vector<8x1xf32>
    %9 = vector.extract_strided_slice %0 {offsets = [1, 0], sizes = [1, 128], strides = [1, 1]} : vector<3x128xf32> to vector<1x128xf32>
    %10 = vector.broadcast %8 : vector<8x1xf32> to vector<8x128xf32>
    %11 = vector.broadcast %9 : vector<1x128xf32> to vector<8x128xf32>
    %12 = arith.mulf %10, %11 : vector<8x128xf32>
    %13 = arith.addf %7, %12 : vector<8x128xf32>
    %14 = vector.extract_strided_slice %1 {offsets = [0, 2], sizes = [8, 1], strides = [1, 1]} : vector<8x3xf32> to vector<8x1xf32>
    %15 = vector.extract_strided_slice %0 {offsets = [2, 0], sizes = [1, 128], strides = [1, 1]} : vector<3x128xf32> to vector<1x128xf32>
    %16 = vector.broadcast %14 : vector<8x1xf32> to vector<8x128xf32>
    %17 = vector.broadcast %15 : vector<1x128xf32> to vector<8x128xf32>
    %18 = arith.mulf %16, %17 : vector<8x128xf32>
    %19 = arith.addf %13, %18 : vector<8x128xf32>
    %20 = vector.broadcast %2 : vector<8x1xf32> to vector<8x128xf32>
    %21 = arith.addf %19, %20 : vector<8x128xf32>
    %c0_i32 = arith.constant 0 : i32
    %22 = vector.broadcast %c0_i32 : i32 to vector<8x128xi32>
    %c8 = arith.constant 8 : index
    %c0_5 = arith.constant 0 : index
    %23 = vector.load %arg2[%c8, %c0_5] : memref<104x3xf32, #tpu.memory_space<vmem>>, vector<8x3xf32>
    %c8_6 = arith.constant 8 : index
    %c0_7 = arith.constant 0 : index
    %24 = vector.load %arg3[%c8_6, %c0_7] : memref<104x1xf32, #tpu.memory_space<vmem>>, vector<8x1xf32>
    %25 = vector.extract_strided_slice %23 {offsets = [0, 0], sizes = [8, 1], strides = [1, 1]} : vector<8x3xf32> to vector<8x1xf32>
    %26 = vector.extract_strided_slice %0 {offsets = [0, 0], sizes = [1, 128], strides = [1, 1]} : vector<3x128xf32> to vector<1x128xf32>
    %27 = vector.broadcast %25 : vector<8x1xf32> to vector<8x128xf32>
    %28 = vector.broadcast %26 : vector<1x128xf32> to vector<8x128xf32>
    %29 = arith.mulf %27, %28 : vector<8x128xf32>
    %30 = vector.extract_strided_slice %23 {offsets = [0, 1], sizes = [8, 1], strides = [1, 1]} : vector<8x3xf32> to vector<8x1xf32>
    %31 = vector.extract_strided_slice %0 {offsets = [1, 0], sizes = [1, 128], strides = [1, 1]} : vector<3x128xf32> to vector<1x128xf32>
    %32 = vector.broadcast %30 : vector<8x1xf32> to vector<8x128xf32>
    %33 = vector.broadcast %31 : vector<1x128xf32> to vector<8x128xf32>
    %34 = arith.mulf %32, %33 : vector<8x128xf32>
    %35 = arith.addf %29, %34 : vector<8x128xf32>
    %36 = vector.extract_strided_slice %23 {offsets = [0, 2], sizes = [8, 1], strides = [1, 1]} : vector<8x3xf32> to vector<8x1xf32>
    %37 = vector.extract_strided_slice %0 {offsets = [2, 0], sizes = [1, 128], strides = [1, 1]} : vector<3x128xf32> to vector<1x128xf32>
    %38 = vector.broadcast %36 : vector<8x1xf32> to vector<8x128xf32>
    %39 = vector.broadcast %37 : vector<1x128xf32> to vector<8x128xf32>
    %40 = arith.mulf %38, %39 : vector<8x128xf32>
    %41 = arith.addf %35, %40 : vector<8x128xf32>
    %42 = vector.broadcast %24 : vector<8x1xf32> to vector<8x128xf32>
    %43 = arith.addf %41, %42 : vector<8x128xf32>
    %44 = arith.cmpf olt, %43, %21 : vector<8x128xf32>
    %45 = arith.select %44, %43, %21 : vector<8x128xi1>, vector<8x128xf32>
    %c1_i32 = arith.constant 1 : i32
    %46 = vector.broadcast %c1_i32 : i32 to vector<8x128xi32>
    %47 = arith.select %44, %46, %22 : vector<8x128xi1>, vector<8x128xi32>
    %c16 = arith.constant 16 : index
    %c0_8 = arith.constant 0 : index
    %48 = vector.load %arg2[%c16, %c0_8] : memref<104x3xf32, #tpu.memory_space<vmem>>, vector<8x3xf32>
    %c16_9 = arith.constant 16 : index
    %c0_10 = arith.constant 0 : index
    %49 = vector.load %arg3[%c16_9, %c0_10] : memref<104x1xf32, #tpu.memory_space<vmem>>, vector<8x1xf32>
    %50 = vector.extract_strided_slice %48 {offsets = [0, 0], sizes = [8, 1], strides = [1, 1]} : vector<8x3xf32> to vector<8x1xf32>
    %51 = vector.extract_strided_slice %0 {offsets = [0, 0], sizes = [1, 128], strides = [1, 1]} : vector<3x128xf32> to vector<1x128xf32>
    %52 = vector.broadcast %50 : vector<8x1xf32> to vector<8x128xf32>
    %53 = vector.broadcast %51 : vector<1x128xf32> to vector<8x128xf32>
    %54 = arith.mulf %52, %53 : vector<8x128xf32>
    %55 = vector.extract_strided_slice %48 {offsets = [0, 1], sizes = [8, 1], strides = [1, 1]} : vector<8x3xf32> to vector<8x1xf32>
    %56 = vector.extract_strided_slice %0 {offsets = [1, 0], sizes = [1, 128], strides = [1, 1]} : vector<3x128xf32> to vector<1x128xf32>
    %57 = vector.broadcast %55 : vector<8x1xf32> to vector<8x128xf32>
    %58 = vector.broadcast %56 : vector<1x128xf32> to vector<8x128xf32>
    %59 = arith.mulf %57, %58 : vector<8x128xf32>
    %60 = arith.addf %54, %59 : vector<8x128xf32>
    %61 = vector.extract_strided_slice %48 {offsets = [0, 2], sizes = [8, 1], strides = [1, 1]} : vector<8x3xf32> to vector<8x1xf32>
    %62 = vector.extract_strided_slice %0 {offsets = [2, 0], sizes = [1, 128], strides = [1, 1]} : vector<3x128xf32> to vector<1x128xf32>
    %63 = vector.broadcast %61 : vector<8x1xf32> to vector<8x128xf32>
    %64 = vector.broadcast %62 : vector<1x128xf32> to vector<8x128xf32>
    %65 = arith.mulf %63, %64 : vector<8x128xf32>
    %66 = arith.addf %60, %65 : vector<8x128xf32>
    %67 = vector.broadcast %49 : vector<8x1xf32> to vector<8x128xf32>
    %68 = arith.addf %66, %67 : vector<8x128xf32>
    %69 = arith.cmpf olt, %68, %45 : vector<8x128xf32>
    %70 = arith.select %69, %68, %45 : vector<8x128xi1>, vector<8x128xf32>
    %c2_i32 = arith.constant 2 : i32
    %71 = vector.broadcast %c2_i32 : i32 to vector<8x128xi32>
    %72 = arith.select %69, %71, %47 : vector<8x128xi1>, vector<8x128xi32>
    %c24 = arith.constant 24 : index
    %c0_11 = arith.constant 0 : index
    %73 = vector.load %arg2[%c24, %c0_11] : memref<104x3xf32, #tpu.memory_space<vmem>>, vector<8x3xf32>
    %c24_12 = arith.constant 24 : index
    %c0_13 = arith.constant 0 : index
    %74 = vector.load %arg3[%c24_12, %c0_13] : memref<104x1xf32, #tpu.memory_space<vmem>>, vector<8x1xf32>
    %75 = vector.extract_strided_slice %73 {offsets = [0, 0], sizes = [8, 1], strides = [1, 1]} : vector<8x3xf32> to vector<8x1xf32>
    %76 = vector.extract_strided_slice %0 {offsets = [0, 0], sizes = [1, 128], strides = [1, 1]} : vector<3x128xf32> to vector<1x128xf32>
    %77 = vector.broadcast %75 : vector<8x1xf32> to vector<8x128xf32>
    %78 = vector.broadcast %76 : vector<1x128xf32> to vector<8x128xf32>
    %79 = arith.mulf %77, %78 : vector<8x128xf32>
    %80 = vector.extract_strided_slice %73 {offsets = [0, 1], sizes = [8, 1], strides = [1, 1]} : vector<8x3xf32> to vector<8x1xf32>
    %81 = vector.extract_strided_slice %0 {offsets = [1, 0], sizes = [1, 128], strides = [1, 1]} : vector<3x128xf32> to vector<1x128xf32>
    %82 = vector.broadcast %80 : vector<8x1xf32> to vector<8x128xf32>
    %83 = vector.broadcast %81 : vector<1x128xf32> to vector<8x128xf32>
    %84 = arith.mulf %82, %83 : vector<8x128xf32>
    %85 = arith.addf %79, %84 : vector<8x128xf32>
    %86 = vector.extract_strided_slice %73 {offsets = [0, 2], sizes = [8, 1], strides = [1, 1]} : vector<8x3xf32> to vector<8x1xf32>
    %87 = vector.extract_strided_slice %0 {offsets = [2, 0], sizes = [1, 128], strides = [1, 1]} : vector<3x128xf32> to vector<1x128xf32>
    %88 = vector.broadcast %86 : vector<8x1xf32> to vector<8x128xf32>
    %89 = vector.broadcast %87 : vector<1x128xf32> to vector<8x128xf32>
    %90 = arith.mulf %88, %89 : vector<8x128xf32>
    %91 = arith.addf %85, %90 : vector<8x128xf32>
    %92 = vector.broadcast %74 : vector<8x1xf32> to vector<8x128xf32>
    %93 = arith.addf %91, %92 : vector<8x128xf32>
    %94 = arith.cmpf olt, %93, %70 : vector<8x128xf32>
    %95 = arith.select %94, %93, %70 : vector<8x128xi1>, vector<8x128xf32>
    %c3_i32 = arith.constant 3 : i32
    %96 = vector.broadcast %c3_i32 : i32 to vector<8x128xi32>
    %97 = arith.select %94, %96, %72 : vector<8x128xi1>, vector<8x128xi32>
    %c32 = arith.constant 32 : index
    %c0_14 = arith.constant 0 : index
    %98 = vector.load %arg2[%c32, %c0_14] : memref<104x3xf32, #tpu.memory_space<vmem>>, vector<8x3xf32>
    %c32_15 = arith.constant 32 : index
    %c0_16 = arith.constant 0 : index
    %99 = vector.load %arg3[%c32_15, %c0_16] : memref<104x1xf32, #tpu.memory_space<vmem>>, vector<8x1xf32>
    %100 = vector.extract_strided_slice %98 {offsets = [0, 0], sizes = [8, 1], strides = [1, 1]} : vector<8x3xf32> to vector<8x1xf32>
    %101 = vector.extract_strided_slice %0 {offsets = [0, 0], sizes = [1, 128], strides = [1, 1]} : vector<3x128xf32> to vector<1x128xf32>
    %102 = vector.broadcast %100 : vector<8x1xf32> to vector<8x128xf32>
    %103 = vector.broadcast %101 : vector<1x128xf32> to vector<8x128xf32>
    %104 = arith.mulf %102, %103 : vector<8x128xf32>
    %105 = vector.extract_strided_slice %98 {offsets = [0, 1], sizes = [8, 1], strides = [1, 1]} : vector<8x3xf32> to vector<8x1xf32>
    %106 = vector.extract_strided_slice %0 {offsets = [1, 0], sizes = [1, 128], strides = [1, 1]} : vector<3x128xf32> to vector<1x128xf32>
    %107 = vector.broadcast %105 : vector<8x1xf32> to vector<8x128xf32>
    %108 = vector.broadcast %106 : vector<1x128xf32> to vector<8x128xf32>
    %109 = arith.mulf %107, %108 : vector<8x128xf32>
    %110 = arith.addf %104, %109 : vector<8x128xf32>
    %111 = vector.extract_strided_slice %98 {offsets = [0, 2], sizes = [8, 1], strides = [1, 1]} : vector<8x3xf32> to vector<8x1xf32>
    %112 = vector.extract_strided_slice %0 {offsets = [2, 0], sizes = [1, 128], strides = [1, 1]} : vector<3x128xf32> to vector<1x128xf32>
    %113 = vector.broadcast %111 : vector<8x1xf32> to vector<8x128xf32>
    %114 = vector.broadcast %112 : vector<1x128xf32> to vector<8x128xf32>
    %115 = arith.mulf %113, %114 : vector<8x128xf32>
    %116 = arith.addf %110, %115 : vector<8x128xf32>
    %117 = vector.broadcast %99 : vector<8x1xf32> to vector<8x128xf32>
    %118 = arith.addf %116, %117 : vector<8x128xf32>
    %119 = arith.cmpf olt, %118, %95 : vector<8x128xf32>
    %120 = arith.select %119, %118, %95 : vector<8x128xi1>, vector<8x128xf32>
    %c4_i32 = arith.constant 4 : i32
    %121 = vector.broadcast %c4_i32 : i32 to vector<8x128xi32>
    %122 = arith.select %119, %121, %97 : vector<8x128xi1>, vector<8x128xi32>
    %c40 = arith.constant 40 : index
    %c0_17 = arith.constant 0 : index
    %123 = vector.load %arg2[%c40, %c0_17] : memref<104x3xf32, #tpu.memory_space<vmem>>, vector<8x3xf32>
    %c40_18 = arith.constant 40 : index
    %c0_19 = arith.constant 0 : index
    %124 = vector.load %arg3[%c40_18, %c0_19] : memref<104x1xf32, #tpu.memory_space<vmem>>, vector<8x1xf32>
    %125 = vector.extract_strided_slice %123 {offsets = [0, 0], sizes = [8, 1], strides = [1, 1]} : vector<8x3xf32> to vector<8x1xf32>
    %126 = vector.extract_strided_slice %0 {offsets = [0, 0], sizes = [1, 128], strides = [1, 1]} : vector<3x128xf32> to vector<1x128xf32>
    %127 = vector.broadcast %125 : vector<8x1xf32> to vector<8x128xf32>
    %128 = vector.broadcast %126 : vector<1x128xf32> to vector<8x128xf32>
    %129 = arith.mulf %127, %128 : vector<8x128xf32>
    %130 = vector.extract_strided_slice %123 {offsets = [0, 1], sizes = [8, 1], strides = [1, 1]} : vector<8x3xf32> to vector<8x1xf32>
    %131 = vector.extract_strided_slice %0 {offsets = [1, 0], sizes = [1, 128], strides = [1, 1]} : vector<3x128xf32> to vector<1x128xf32>
    %132 = vector.broadcast %130 : vector<8x1xf32> to vector<8x128xf32>
    %133 = vector.broadcast %131 : vector<1x128xf32> to vector<8x128xf32>
    %134 = arith.mulf %132, %133 : vector<8x128xf32>
    %135 = arith.addf %129, %134 : vector<8x128xf32>
    %136 = vector.extract_strided_slice %123 {offsets = [0, 2], sizes = [8, 1], strides = [1, 1]} : vector<8x3xf32> to vector<8x1xf32>
    %137 = vector.extract_strided_slice %0 {offsets = [2, 0], sizes = [1, 128], strides = [1, 1]} : vector<3x128xf32> to vector<1x128xf32>
    %138 = vector.broadcast %136 : vector<8x1xf32> to vector<8x128xf32>
    %139 = vector.broadcast %137 : vector<1x128xf32> to vector<8x128xf32>
    %140 = arith.mulf %138, %139 : vector<8x128xf32>
    %141 = arith.addf %135, %140 : vector<8x128xf32>
    %142 = vector.broadcast %124 : vector<8x1xf32> to vector<8x128xf32>
    %143 = arith.addf %141, %142 : vector<8x128xf32>
    %144 = arith.cmpf olt, %143, %120 : vector<8x128xf32>
    %145 = arith.select %144, %143, %120 : vector<8x128xi1>, vector<8x128xf32>
    %c5_i32 = arith.constant 5 : i32
    %146 = vector.broadcast %c5_i32 : i32 to vector<8x128xi32>
    %147 = arith.select %144, %146, %122 : vector<8x128xi1>, vector<8x128xi32>
    %c48 = arith.constant 48 : index
    %c0_20 = arith.constant 0 : index
    %148 = vector.load %arg2[%c48, %c0_20] : memref<104x3xf32, #tpu.memory_space<vmem>>, vector<8x3xf32>
    %c48_21 = arith.constant 48 : index
    %c0_22 = arith.constant 0 : index
    %149 = vector.load %arg3[%c48_21, %c0_22] : memref<104x1xf32, #tpu.memory_space<vmem>>, vector<8x1xf32>
    %150 = vector.extract_strided_slice %148 {offsets = [0, 0], sizes = [8, 1], strides = [1, 1]} : vector<8x3xf32> to vector<8x1xf32>
    %151 = vector.extract_strided_slice %0 {offsets = [0, 0], sizes = [1, 128], strides = [1, 1]} : vector<3x128xf32> to vector<1x128xf32>
    %152 = vector.broadcast %150 : vector<8x1xf32> to vector<8x128xf32>
    %153 = vector.broadcast %151 : vector<1x128xf32> to vector<8x128xf32>
    %154 = arith.mulf %152, %153 : vector<8x128xf32>
    %155 = vector.extract_strided_slice %148 {offsets = [0, 1], sizes = [8, 1], strides = [1, 1]} : vector<8x3xf32> to vector<8x1xf32>
    %156 = vector.extract_strided_slice %0 {offsets = [1, 0], sizes = [1, 128], strides = [1, 1]} : vector<3x128xf32> to vector<1x128xf32>
    %157 = vector.broadcast %155 : vector<8x1xf32> to vector<8x128xf32>
    %158 = vector.broadcast %156 : vector<1x128xf32> to vector<8x128xf32>
    %159 = arith.mulf %157, %158 : vector<8x128xf32>
    %160 = arith.addf %154, %159 : vector<8x128xf32>
    %161 = vector.extract_strided_slice %148 {offsets = [0, 2], sizes = [8, 1], strides = [1, 1]} : vector<8x3xf32> to vector<8x1xf32>
    %162 = vector.extract_strided_slice %0 {offsets = [2, 0], sizes = [1, 128], strides = [1, 1]} : vector<3x128xf32> to vector<1x128xf32>
    %163 = vector.broadcast %161 : vector<8x1xf32> to vector<8x128xf32>
    %164 = vector.broadcast %162 : vector<1x128xf32> to vector<8x128xf32>
    %165 = arith.mulf %163, %164 : vector<8x128xf32>
    %166 = arith.addf %160, %165 : vector<8x128xf32>
    %167 = vector.broadcast %149 : vector<8x1xf32> to vector<8x128xf32>
    %168 = arith.addf %166, %167 : vector<8x128xf32>
    %169 = arith.cmpf olt, %168, %145 : vector<8x128xf32>
    %170 = arith.select %169, %168, %145 : vector<8x128xi1>, vector<8x128xf32>
    %c6_i32 = arith.constant 6 : i32
    %171 = vector.broadcast %c6_i32 : i32 to vector<8x128xi32>
    %172 = arith.select %169, %171, %147 : vector<8x128xi1>, vector<8x128xi32>
    %c56 = arith.constant 56 : index
    %c0_23 = arith.constant 0 : index
    %173 = vector.load %arg2[%c56, %c0_23] : memref<104x3xf32, #tpu.memory_space<vmem>>, vector<8x3xf32>
    %c56_24 = arith.constant 56 : index
    %c0_25 = arith.constant 0 : index
    %174 = vector.load %arg3[%c56_24, %c0_25] : memref<104x1xf32, #tpu.memory_space<vmem>>, vector<8x1xf32>
    %175 = vector.extract_strided_slice %173 {offsets = [0, 0], sizes = [8, 1], strides = [1, 1]} : vector<8x3xf32> to vector<8x1xf32>
    %176 = vector.extract_strided_slice %0 {offsets = [0, 0], sizes = [1, 128], strides = [1, 1]} : vector<3x128xf32> to vector<1x128xf32>
    %177 = vector.broadcast %175 : vector<8x1xf32> to vector<8x128xf32>
    %178 = vector.broadcast %176 : vector<1x128xf32> to vector<8x128xf32>
    %179 = arith.mulf %177, %178 : vector<8x128xf32>
    %180 = vector.extract_strided_slice %173 {offsets = [0, 1], sizes = [8, 1], strides = [1, 1]} : vector<8x3xf32> to vector<8x1xf32>
    %181 = vector.extract_strided_slice %0 {offsets = [1, 0], sizes = [1, 128], strides = [1, 1]} : vector<3x128xf32> to vector<1x128xf32>
    %182 = vector.broadcast %180 : vector<8x1xf32> to vector<8x128xf32>
    %183 = vector.broadcast %181 : vector<1x128xf32> to vector<8x128xf32>
    %184 = arith.mulf %182, %183 : vector<8x128xf32>
    %185 = arith.addf %179, %184 : vector<8x128xf32>
    %186 = vector.extract_strided_slice %173 {offsets = [0, 2], sizes = [8, 1], strides = [1, 1]} : vector<8x3xf32> to vector<8x1xf32>
    %187 = vector.extract_strided_slice %0 {offsets = [2, 0], sizes = [1, 128], strides = [1, 1]} : vector<3x128xf32> to vector<1x128xf32>
    %188 = vector.broadcast %186 : vector<8x1xf32> to vector<8x128xf32>
    %189 = vector.broadcast %187 : vector<1x128xf32> to vector<8x128xf32>
    %190 = arith.mulf %188, %189 : vector<8x128xf32>
    %191 = arith.addf %185, %190 : vector<8x128xf32>
    %192 = vector.broadcast %174 : vector<8x1xf32> to vector<8x128xf32>
    %193 = arith.addf %191, %192 : vector<8x128xf32>
    %194 = arith.cmpf olt, %193, %170 : vector<8x128xf32>
    %195 = arith.select %194, %193, %170 : vector<8x128xi1>, vector<8x128xf32>
    %c7_i32 = arith.constant 7 : i32
    %196 = vector.broadcast %c7_i32 : i32 to vector<8x128xi32>
    %197 = arith.select %194, %196, %172 : vector<8x128xi1>, vector<8x128xi32>
    %c64 = arith.constant 64 : index
    %c0_26 = arith.constant 0 : index
    %198 = vector.load %arg2[%c64, %c0_26] : memref<104x3xf32, #tpu.memory_space<vmem>>, vector<8x3xf32>
    %c64_27 = arith.constant 64 : index
    %c0_28 = arith.constant 0 : index
    %199 = vector.load %arg3[%c64_27, %c0_28] : memref<104x1xf32, #tpu.memory_space<vmem>>, vector<8x1xf32>
    %200 = vector.extract_strided_slice %198 {offsets = [0, 0], sizes = [8, 1], strides = [1, 1]} : vector<8x3xf32> to vector<8x1xf32>
    %201 = vector.extract_strided_slice %0 {offsets = [0, 0], sizes = [1, 128], strides = [1, 1]} : vector<3x128xf32> to vector<1x128xf32>
    %202 = vector.broadcast %200 : vector<8x1xf32> to vector<8x128xf32>
    %203 = vector.broadcast %201 : vector<1x128xf32> to vector<8x128xf32>
    %204 = arith.mulf %202, %203 : vector<8x128xf32>
    %205 = vector.extract_strided_slice %198 {offsets = [0, 1], sizes = [8, 1], strides = [1, 1]} : vector<8x3xf32> to vector<8x1xf32>
    %206 = vector.extract_strided_slice %0 {offsets = [1, 0], sizes = [1, 128], strides = [1, 1]} : vector<3x128xf32> to vector<1x128xf32>
    %207 = vector.broadcast %205 : vector<8x1xf32> to vector<8x128xf32>
    %208 = vector.broadcast %206 : vector<1x128xf32> to vector<8x128xf32>
    %209 = arith.mulf %207, %208 : vector<8x128xf32>
    %210 = arith.addf %204, %209 : vector<8x128xf32>
    %211 = vector.extract_strided_slice %198 {offsets = [0, 2], sizes = [8, 1], strides = [1, 1]} : vector<8x3xf32> to vector<8x1xf32>
    %212 = vector.extract_strided_slice %0 {offsets = [2, 0], sizes = [1, 128], strides = [1, 1]} : vector<3x128xf32> to vector<1x128xf32>
    %213 = vector.broadcast %211 : vector<8x1xf32> to vector<8x128xf32>
    %214 = vector.broadcast %212 : vector<1x128xf32> to vector<8x128xf32>
    %215 = arith.mulf %213, %214 : vector<8x128xf32>
    %216 = arith.addf %210, %215 : vector<8x128xf32>
    %217 = vector.broadcast %199 : vector<8x1xf32> to vector<8x128xf32>
    %218 = arith.addf %216, %217 : vector<8x128xf32>
    %219 = arith.cmpf olt, %218, %195 : vector<8x128xf32>
    %220 = arith.select %219, %218, %195 : vector<8x128xi1>, vector<8x128xf32>
    %c8_i32 = arith.constant 8 : i32
    %221 = vector.broadcast %c8_i32 : i32 to vector<8x128xi32>
    %222 = arith.select %219, %221, %197 : vector<8x128xi1>, vector<8x128xi32>
    %c72 = arith.constant 72 : index
    %c0_29 = arith.constant 0 : index
    %223 = vector.load %arg2[%c72, %c0_29] : memref<104x3xf32, #tpu.memory_space<vmem>>, vector<8x3xf32>
    %c72_30 = arith.constant 72 : index
    %c0_31 = arith.constant 0 : index
    %224 = vector.load %arg3[%c72_30, %c0_31] : memref<104x1xf32, #tpu.memory_space<vmem>>, vector<8x1xf32>
    %225 = vector.extract_strided_slice %223 {offsets = [0, 0], sizes = [8, 1], strides = [1, 1]} : vector<8x3xf32> to vector<8x1xf32>
    %226 = vector.extract_strided_slice %0 {offsets = [0, 0], sizes = [1, 128], strides = [1, 1]} : vector<3x128xf32> to vector<1x128xf32>
    %227 = vector.broadcast %225 : vector<8x1xf32> to vector<8x128xf32>
    %228 = vector.broadcast %226 : vector<1x128xf32> to vector<8x128xf32>
    %229 = arith.mulf %227, %228 : vector<8x128xf32>
    %230 = vector.extract_strided_slice %223 {offsets = [0, 1], sizes = [8, 1], strides = [1, 1]} : vector<8x3xf32> to vector<8x1xf32>
    %231 = vector.extract_strided_slice %0 {offsets = [1, 0], sizes = [1, 128], strides = [1, 1]} : vector<3x128xf32> to vector<1x128xf32>
    %232 = vector.broadcast %230 : vector<8x1xf32> to vector<8x128xf32>
    %233 = vector.broadcast %231 : vector<1x128xf32> to vector<8x128xf32>
    %234 = arith.mulf %232, %233 : vector<8x128xf32>
    %235 = arith.addf %229, %234 : vector<8x128xf32>
    %236 = vector.extract_strided_slice %223 {offsets = [0, 2], sizes = [8, 1], strides = [1, 1]} : vector<8x3xf32> to vector<8x1xf32>
    %237 = vector.extract_strided_slice %0 {offsets = [2, 0], sizes = [1, 128], strides = [1, 1]} : vector<3x128xf32> to vector<1x128xf32>
    %238 = vector.broadcast %236 : vector<8x1xf32> to vector<8x128xf32>
    %239 = vector.broadcast %237 : vector<1x128xf32> to vector<8x128xf32>
    %240 = arith.mulf %238, %239 : vector<8x128xf32>
    %241 = arith.addf %235, %240 : vector<8x128xf32>
    %242 = vector.broadcast %224 : vector<8x1xf32> to vector<8x128xf32>
    %243 = arith.addf %241, %242 : vector<8x128xf32>
    %244 = arith.cmpf olt, %243, %220 : vector<8x128xf32>
    %245 = arith.select %244, %243, %220 : vector<8x128xi1>, vector<8x128xf32>
    %c9_i32 = arith.constant 9 : i32
    %246 = vector.broadcast %c9_i32 : i32 to vector<8x128xi32>
    %247 = arith.select %244, %246, %222 : vector<8x128xi1>, vector<8x128xi32>
    %c80 = arith.constant 80 : index
    %c0_32 = arith.constant 0 : index
    %248 = vector.load %arg2[%c80, %c0_32] : memref<104x3xf32, #tpu.memory_space<vmem>>, vector<8x3xf32>
    %c80_33 = arith.constant 80 : index
    %c0_34 = arith.constant 0 : index
    %249 = vector.load %arg3[%c80_33, %c0_34] : memref<104x1xf32, #tpu.memory_space<vmem>>, vector<8x1xf32>
    %250 = vector.extract_strided_slice %248 {offsets = [0, 0], sizes = [8, 1], strides = [1, 1]} : vector<8x3xf32> to vector<8x1xf32>
    %251 = vector.extract_strided_slice %0 {offsets = [0, 0], sizes = [1, 128], strides = [1, 1]} : vector<3x128xf32> to vector<1x128xf32>
    %252 = vector.broadcast %250 : vector<8x1xf32> to vector<8x128xf32>
    %253 = vector.broadcast %251 : vector<1x128xf32> to vector<8x128xf32>
    %254 = arith.mulf %252, %253 : vector<8x128xf32>
    %255 = vector.extract_strided_slice %248 {offsets = [0, 1], sizes = [8, 1], strides = [1, 1]} : vector<8x3xf32> to vector<8x1xf32>
    %256 = vector.extract_strided_slice %0 {offsets = [1, 0], sizes = [1, 128], strides = [1, 1]} : vector<3x128xf32> to vector<1x128xf32>
    %257 = vector.broadcast %255 : vector<8x1xf32> to vector<8x128xf32>
    %258 = vector.broadcast %256 : vector<1x128xf32> to vector<8x128xf32>
    %259 = arith.mulf %257, %258 : vector<8x128xf32>
    %260 = arith.addf %254, %259 : vector<8x128xf32>
    %261 = vector.extract_strided_slice %248 {offsets = [0, 2], sizes = [8, 1], strides = [1, 1]} : vector<8x3xf32> to vector<8x1xf32>
    %262 = vector.extract_strided_slice %0 {offsets = [2, 0], sizes = [1, 128], strides = [1, 1]} : vector<3x128xf32> to vector<1x128xf32>
    %263 = vector.broadcast %261 : vector<8x1xf32> to vector<8x128xf32>
    %264 = vector.broadcast %262 : vector<1x128xf32> to vector<8x128xf32>
    %265 = arith.mulf %263, %264 : vector<8x128xf32>
    %266 = arith.addf %260, %265 : vector<8x128xf32>
    %267 = vector.broadcast %249 : vector<8x1xf32> to vector<8x128xf32>
    %268 = arith.addf %266, %267 : vector<8x128xf32>
    %269 = arith.cmpf olt, %268, %245 : vector<8x128xf32>
    %270 = arith.select %269, %268, %245 : vector<8x128xi1>, vector<8x128xf32>
    %c10_i32 = arith.constant 10 : i32
    %271 = vector.broadcast %c10_i32 : i32 to vector<8x128xi32>
    %272 = arith.select %269, %271, %247 : vector<8x128xi1>, vector<8x128xi32>
    %c88 = arith.constant 88 : index
    %c0_35 = arith.constant 0 : index
    %273 = vector.load %arg2[%c88, %c0_35] : memref<104x3xf32, #tpu.memory_space<vmem>>, vector<8x3xf32>
    %c88_36 = arith.constant 88 : index
    %c0_37 = arith.constant 0 : index
    %274 = vector.load %arg3[%c88_36, %c0_37] : memref<104x1xf32, #tpu.memory_space<vmem>>, vector<8x1xf32>
    %275 = vector.extract_strided_slice %273 {offsets = [0, 0], sizes = [8, 1], strides = [1, 1]} : vector<8x3xf32> to vector<8x1xf32>
    %276 = vector.extract_strided_slice %0 {offsets = [0, 0], sizes = [1, 128], strides = [1, 1]} : vector<3x128xf32> to vector<1x128xf32>
    %277 = vector.broadcast %275 : vector<8x1xf32> to vector<8x128xf32>
    %278 = vector.broadcast %276 : vector<1x128xf32> to vector<8x128xf32>
    %279 = arith.mulf %277, %278 : vector<8x128xf32>
    %280 = vector.extract_strided_slice %273 {offsets = [0, 1], sizes = [8, 1], strides = [1, 1]} : vector<8x3xf32> to vector<8x1xf32>
    %281 = vector.extract_strided_slice %0 {offsets = [1, 0], sizes = [1, 128], strides = [1, 1]} : vector<3x128xf32> to vector<1x128xf32>
    %282 = vector.broadcast %280 : vector<8x1xf32> to vector<8x128xf32>
    %283 = vector.broadcast %281 : vector<1x128xf32> to vector<8x128xf32>
    %284 = arith.mulf %282, %283 : vector<8x128xf32>
    %285 = arith.addf %279, %284 : vector<8x128xf32>
    %286 = vector.extract_strided_slice %273 {offsets = [0, 2], sizes = [8, 1], strides = [1, 1]} : vector<8x3xf32> to vector<8x1xf32>
    %287 = vector.extract_strided_slice %0 {offsets = [2, 0], sizes = [1, 128], strides = [1, 1]} : vector<3x128xf32> to vector<1x128xf32>
    %288 = vector.broadcast %286 : vector<8x1xf32> to vector<8x128xf32>
    %289 = vector.broadcast %287 : vector<1x128xf32> to vector<8x128xf32>
    %290 = arith.mulf %288, %289 : vector<8x128xf32>
    %291 = arith.addf %285, %290 : vector<8x128xf32>
    %292 = vector.broadcast %274 : vector<8x1xf32> to vector<8x128xf32>
    %293 = arith.addf %291, %292 : vector<8x128xf32>
    %294 = arith.cmpf olt, %293, %270 : vector<8x128xf32>
    %295 = arith.select %294, %293, %270 : vector<8x128xi1>, vector<8x128xf32>
    %c11_i32 = arith.constant 11 : i32
    %296 = vector.broadcast %c11_i32 : i32 to vector<8x128xi32>
    %297 = arith.select %294, %296, %272 : vector<8x128xi1>, vector<8x128xi32>
    %c96 = arith.constant 96 : index
    %c0_38 = arith.constant 0 : index
    %298 = vector.load %arg2[%c96, %c0_38] : memref<104x3xf32, #tpu.memory_space<vmem>>, vector<8x3xf32>
    %c96_39 = arith.constant 96 : index
    %c0_40 = arith.constant 0 : index
    %299 = vector.load %arg3[%c96_39, %c0_40] : memref<104x1xf32, #tpu.memory_space<vmem>>, vector<8x1xf32>
    %300 = vector.extract_strided_slice %298 {offsets = [0, 0], sizes = [8, 1], strides = [1, 1]} : vector<8x3xf32> to vector<8x1xf32>
    %301 = vector.extract_strided_slice %0 {offsets = [0, 0], sizes = [1, 128], strides = [1, 1]} : vector<3x128xf32> to vector<1x128xf32>
    %302 = vector.broadcast %300 : vector<8x1xf32> to vector<8x128xf32>
    %303 = vector.broadcast %301 : vector<1x128xf32> to vector<8x128xf32>
    %304 = arith.mulf %302, %303 : vector<8x128xf32>
    %305 = vector.extract_strided_slice %298 {offsets = [0, 1], sizes = [8, 1], strides = [1, 1]} : vector<8x3xf32> to vector<8x1xf32>
    %306 = vector.extract_strided_slice %0 {offsets = [1, 0], sizes = [1, 128], strides = [1, 1]} : vector<3x128xf32> to vector<1x128xf32>
    %307 = vector.broadcast %305 : vector<8x1xf32> to vector<8x128xf32>
    %308 = vector.broadcast %306 : vector<1x128xf32> to vector<8x128xf32>
    %309 = arith.mulf %307, %308 : vector<8x128xf32>
    %310 = arith.addf %304, %309 : vector<8x128xf32>
    %311 = vector.extract_strided_slice %298 {offsets = [0, 2], sizes = [8, 1], strides = [1, 1]} : vector<8x3xf32> to vector<8x1xf32>
    %312 = vector.extract_strided_slice %0 {offsets = [2, 0], sizes = [1, 128], strides = [1, 1]} : vector<3x128xf32> to vector<1x128xf32>
    %313 = vector.broadcast %311 : vector<8x1xf32> to vector<8x128xf32>
    %314 = vector.broadcast %312 : vector<1x128xf32> to vector<8x128xf32>
    %315 = arith.mulf %313, %314 : vector<8x128xf32>
    %316 = arith.addf %310, %315 : vector<8x128xf32>
    %317 = vector.broadcast %299 : vector<8x1xf32> to vector<8x128xf32>
    %318 = arith.addf %316, %317 : vector<8x128xf32>
    %319 = arith.cmpf olt, %318, %295 : vector<8x128xf32>
    %320 = arith.select %319, %318, %295 : vector<8x128xi1>, vector<8x128xf32>
    %c12_i32 = arith.constant 12 : i32
    %321 = vector.broadcast %c12_i32 : i32 to vector<8x128xi32>
    %322 = arith.select %319, %321, %297 : vector<8x128xi1>, vector<8x128xi32>
    %323 = tpu.iota {dimensions = array<i32: 0>} : vector<8x128xi32>
    %c8_i32_41 = arith.constant 8 : i32
    %324 = vector.broadcast %c8_i32_41 : i32 to vector<8x128xi32>
    %325 = arith.muli %322, %324 : vector<8x128xi32>
    %326 = arith.addi %325, %323 : vector<8x128xi32>
    %cst = arith.constant dense<0x7F800000> : vector<128xf32>
    %327 = vector.multi_reduction <minimumf>, %320, %cst [0] : vector<8x128xf32> to vector<128xf32>
    %328 = vector.shape_cast %327 : vector<128xf32> to vector<1x128xf32>
    %329 = vector.broadcast %328 : vector<1x128xf32> to vector<8x128xf32>
    %330 = arith.cmpf oeq, %320, %329 : vector<8x128xf32>
    %c104_i32 = arith.constant 104 : i32
    %331 = vector.broadcast %c104_i32 : i32 to vector<8x128xi32>
    %332 = arith.select %330, %326, %331 : vector<8x128xi1>, vector<8x128xi32>
    %cst_42 = arith.constant dense<2147483647> : vector<128xi32>
    %333 = vector.multi_reduction <minsi>, %332, %cst_42 [0] : vector<8x128xi32> to vector<128xi32>
    %334 = vector.shape_cast %333 : vector<128xi32> to vector<1x128xi32>
    %c0_43 = arith.constant 0 : index
    %c0_44 = arith.constant 0 : index
    %335 = vector.load %arg4[%c0_43, %c0_44] : memref<1x128xi32, #tpu.memory_space<vmem>>, vector<1x128xi32>
    tpu.vector_store %arg4[%c0_43, %c0_44], %334 {strides = array<i32>} : memref<1x128xi32, #tpu.memory_space<vmem>>, vector<1x128xi32>,
    return
  }
  func.func @transform_0(%arg0: i32) -> (i32, i32) {
    %c0_i32 = arith.constant 0 : i32
    %c0_i32_0 = arith.constant 0 : i32
    return %c0_i32, %arg0 : i32, i32
  }
  func.func @transform_1(%arg0: i32) -> (i32, i32) {
    %c0_i32 = arith.constant 0 : i32
    %c0_i32_0 = arith.constant 0 : i32
    %c0_i32_1 = arith.constant 0 : i32
    return %c0_i32, %c0_i32_0 : i32, i32
  }
  func.func @transform_2(%arg0: i32) -> (i32, i32) {
    %c0_i32 = arith.constant 0 : i32
    %c0_i32_0 = arith.constant 0 : i32
    %c0_i32_1 = arith.constant 0 : i32
    return %c0_i32, %c0_i32_0 : i32, i32
  }
  func.func @transform_3(%arg0: i32) -> (i32, i32) {
    %c0_i32 = arith.constant 0 : i32
    %c0_i32_0 = arith.constant 0 : i32
    return %c0_i32, %arg0 : i32, i32
  }
}

</mosaic_0001>

<llo_original>
// kernel: tpu_custom_call.1
$region0: #{tpu_custom_call.1}
  #allocation0 [shape = 'u32[]', space=smem, size = 0x4, offset = 0x4, fixed_abs, tag = 'smem constant byte address 0x4 - core index']
  #allocation1 [shape = 'u32[144,128]{1,0:T(1,128)}', space=vmem, size = 0x12000, scoped, tag = 'internal scratch']
  %s0 = inlined_call_operand.vmem [shape: f32[3,128], index: 0, kind: input, shape index: {}]
  %s1 = inlined_call_operand.vmem [shape: f32[104,3], index: 1, kind: input, shape index: {}]
  %s2 = inlined_call_operand.vmem [shape: f32[104,1], index: 2, kind: input, shape index: {}]
  %s3 = inlined_call_operand.hbm [shape: s32[1,128], index: 3, kind: output, shape index: {}]
  %s4 = sld [smem:[#allocation0]]
  $region22: #{tpu_custom_call.1} parent=0
    _
  %s6 = ssub.s32 1, %s4
  %s7 = scalar_select 0, %s6, %s4
  $region1: #{tpu_custom_call.1} parent=0
    #allocation2 [shape = 'u8[512]{0}', space=vmem, size = 0x400, scoped, tag = 'output window, operand 0, single buffered']
    #allocation3 [shape = 's32[1]{0}', space=sflag, size = 0x4, scoped, tag = 'scoped memory for tpu_custom_call.1']
    %8 = vsyncpa [#allocation3], 0
    // Predicated region
    $region2: #{tpu_custom_call.1} parent=1 // pred_check
      _
    $region3: #{tpu_custom_call.1} parent=1 // pred_check_branch
      %10 = sbr.rel (0) target = $region5
    $region4: #{tpu_custom_call.1} parent=1 // pred_region
      _
    $region5: #{tpu_custom_call.1} parent=1 // pred_fallthru
      _
    // Predicated region
    $region6: #{tpu_custom_call.1} parent=1 // pred_check
      _
    $region7: #{tpu_custom_call.1} parent=1 // pred_check_branch
      %12 = sbr.rel (0) target = $region9
    $region8: #{tpu_custom_call.1} parent=1 // pred_region
      _
    $region9: #{tpu_custom_call.1} parent=1 // pred_fallthru
      _
    // Predicated region
    $region10: #{tpu_custom_call.1} parent=1 // pred_check
      _
    $region11: #{tpu_custom_call.1} parent=1 // pred_check_branch
      %14 = sbr.rel (0) target = $region13
    $region12: #{tpu_custom_call.1} parent=1 // pred_region
      _
    $region13: #{tpu_custom_call.1} parent=1 // pred_fallthru
      _
    %v15 = vld [vmem:[%s0] sm:$0x7]
    %v16 = vld [vmem:[%s1] sm:$0xff]
    %v17 = vld [vmem:[%s2] sm:$0xff]
    %19 = vset.pattern.permute.xlu0 0
    %20 = vperm.xlu0 %19, %v16
    %v21 = vpop.permute.xlu0 %20
    %v23 = vlaneseq
    %v24 = vshrl.u32 %v23, 7
    %v25 = vsub.s32 0, %v24
    %v26 = vrot.slane %v15, %v25
    %v27 = vmul.f32 %v21, %v26
    %28 = vset.pattern.permute.xlu0 1
    %29 = vperm.xlu0 %28, %v16
    %v30 = vpop.permute.xlu0 %29
    %v32 = vlaneseq
    %v33 = vshrl.u32 %v32, 7
    %v34 = vsub.s32 1, %v33
    %v35 = vrot.slane %v15, %v34
    %v36 = vmul.f32 %v30, %v35
    %v37 = vadd.f32 %v27, %v36
    %38 = vset.pattern.permute.xlu0 2
    %39 = vperm.xlu0 %38, %v16
    %v40 = vpop.permute.xlu0 %39
    %v42 = vlaneseq
    %v43 = vshrl.u32 %v42, 7
    %v44 = vsub.s32 2, %v43
    %v45 = vrot.slane %v15, %v44
    %v46 = vmul.f32 %v40, %v45
    %v47 = vadd.f32 %v37, %v46
    %49 = vset.pattern.permute.xlu0 0
    %50 = vperm.xlu0 %49, %v17
    %v51 = vpop.permute.xlu0 %50
    %v53 = vadd.f32 %v47, %v51
    %v54 = vld [vmem:[%s1 + $0x8] sm:$0xff]
    %v55 = vld [vmem:[%s2 + $0x8] sm:$0xff]
    %57 = vset.pattern.permute.xlu0 0
    %58 = vperm.xlu0 %57, %v54
    %v59 = vpop.permute.xlu0 %58
    %v61 = vmul.f32 %v59, %v26
    %62 = vset.pattern.permute.xlu0 1
    %63 = vperm.xlu0 %62, %v54
    %v64 = vpop.permute.xlu0 %63
    %v66 = vmul.f32 %v64, %v35
    %v67 = vadd.f32 %v61, %v66
    %68 = vset.pattern.permute.xlu0 2
    %69 = vperm.xlu0 %68, %v54
    %v70 = vpop.permute.xlu0 %69
    %v72 = vmul.f32 %v70, %v45
    %v73 = vadd.f32 %v67, %v72
    %75 = vset.pattern.permute.xlu0 0
    %76 = vperm.xlu0 %75, %v55
    %v77 = vpop.permute.xlu0 %76
    %v79 = vadd.f32 %v73, %v77
    %vm80 = vcmp.lt.f32.partialorder %v79, %v53
    %v81 = vsel %vm80, %v79, %v53
    %v82 = vsel %vm80, 1, 0
    %v83 = vld [vmem:[%s1 + $0x10] sm:$0xff]
    %v84 = vld [vmem:[%s2 + $0x10] sm:$0xff]
    %86 = vset.pattern.permute.xlu0 0
    %87 = vperm.xlu0 %86, %v83
    %v88 = vpop.permute.xlu0 %87
    %v90 = vmul.f32 %v88, %v26
    %91 = vset.pattern.permute.xlu0 1
    %92 = vperm.xlu0 %91, %v83
    %v93 = vpop.permute.xlu0 %92
    %v95 = vmul.f32 %v93, %v35
    %v96 = vadd.f32 %v90, %v95
    %97 = vset.pattern.permute.xlu0 2
    %98 = vperm.xlu0 %97, %v83
    %v99 = vpop.permute.xlu0 %98
    %v101 = vmul.f32 %v99, %v45
    %v102 = vadd.f32 %v96, %v101
    %104 = vset.pattern.permute.xlu0 0
    %105 = vperm.xlu0 %104, %v84
    %v106 = vpop.permute.xlu0 %105
    %v108 = vadd.f32 %v102, %v106
    %vm109 = vcmp.lt.f32.partialorder %v108, %v81
    %v110 = vsel %vm109, %v108, %v81
    %v111 = vsel %vm109, 2, %v82
    %v112 = vld [vmem:[%s1 + $0x18] sm:$0xff]
    %v113 = vld [vmem:[%s2 + $0x18] sm:$0xff]
    %115 = vset.pattern.permute.xlu0 0
    %116 = vperm.xlu0 %115, %v112
    %v117 = vpop.permute.xlu0 %116
    %v119 = vmul.f32 %v117, %v26
    %120 = vset.pattern.permute.xlu0 1
    %121 = vperm.xlu0 %120, %v112
    %v122 = vpop.permute.xlu0 %121
    %v124 = vmul.f32 %v122, %v35
    %v125 = vadd.f32 %v119, %v124
    %126 = vset.pattern.permute.xlu0 2
    %127 = vperm.xlu0 %126, %v112
    %v128 = vpop.permute.xlu0 %127
    %v130 = vmul.f32 %v128, %v45
    %v131 = vadd.f32 %v125, %v130
    %133 = vset.pattern.permute.xlu0 0
    %134 = vperm.xlu0 %133, %v113
    %v135 = vpop.permute.xlu0 %134
    %v137 = vadd.f32 %v131, %v135
    %vm138 = vcmp.lt.f32.partialorder %v137, %v110
    %v139 = vsel %vm138, %v137, %v110
    %v140 = vsel %vm138, 3, %v111
    %v141 = vld [vmem:[%s1 + $0x20] sm:$0xff]
    %v142 = vld [vmem:[%s2 + $0x20] sm:$0xff]
    %144 = vset.pattern.permute.xlu0 0
    %145 = vperm.xlu0 %144, %v141
    %v146 = vpop.permute.xlu0 %145
    %v148 = vmul.f32 %v146, %v26
    %149 = vset.pattern.permute.xlu0 1
    %150 = vperm.xlu0 %149, %v141
    %v151 = vpop.permute.xlu0 %150
    %v153 = vmul.f32 %v151, %v35
    %v154 = vadd.f32 %v148, %v153
    %155 = vset.pattern.permute.xlu0 2
    %156 = vperm.xlu0 %155, %v141
    %v157 = vpop.permute.xlu0 %156
    %v159 = vmul.f32 %v157, %v45
    %v160 = vadd.f32 %v154, %v159
    %162 = vset.pattern.permute.xlu0 0
    %163 = vperm.xlu0 %162, %v142
    %v164 = vpop.permute.xlu0 %163
    %v166 = vadd.f32 %v160, %v164
    %vm167 = vcmp.lt.f32.partialorder %v166, %v139
    %v168 = vsel %vm167, %v166, %v139
    %v169 = vsel %vm167, 4, %v140
    %v170 = vld [vmem:[%s1 + $0x28] sm:$0xff]
    %v171 = vld [vmem:[%s2 + $0x28] sm:$0xff]
    %173 = vset.pattern.permute.xlu0 0
    %174 = vperm.xlu0 %173, %v170
    %v175 = vpop.permute.xlu0 %174
    %v177 = vmul.f32 %v175, %v26
    %178 = vset.pattern.permute.xlu0 1
    %179 = vperm.xlu0 %178, %v170
    %v180 = vpop.permute.xlu0 %179
    %v182 = vmul.f32 %v180, %v35
    %v183 = vadd.f32 %v177, %v182
    %184 = vset.pattern.permute.xlu0 2
    %185 = vperm.xlu0 %184, %v170
    %v186 = vpop.permute.xlu0 %185
    %v188 = vmul.f32 %v186, %v45
    %v189 = vadd.f32 %v183, %v188
    %191 = vset.pattern.permute.xlu0 0
    %192 = vperm.xlu0 %191, %v171
    %v193 = vpop.permute.xlu0 %192
    %v195 = vadd.f32 %v189, %v193
    %vm196 = vcmp.lt.f32.partialorder %v195, %v168
    %v197 = vsel %vm196, %v195, %v168
    %v198 = vsel %vm196, 5, %v169
    %v199 = vld [vmem:[%s1 + $0x30] sm:$0xff]
    %v200 = vld [vmem:[%s2 + $0x30] sm:$0xff]
    %202 = vset.pattern.permute.xlu0 0
    %203 = vperm.xlu0 %202, %v199
    %v204 = vpop.permute.xlu0 %203
    %v206 = vmul.f32 %v204, %v26
    %207 = vset.pattern.permute.xlu0 1
    %208 = vperm.xlu0 %207, %v199
    %v209 = vpop.permute.xlu0 %208
    %v211 = vmul.f32 %v209, %v35
    %v212 = vadd.f32 %v206, %v211
    %213 = vset.pattern.permute.xlu0 2
    %214 = vperm.xlu0 %213, %v199
    %v215 = vpop.permute.xlu0 %214
    %v217 = vmul.f32 %v215, %v45
    %v218 = vadd.f32 %v212, %v217
    %220 = vset.pattern.permute.xlu0 0
    %221 = vperm.xlu0 %220, %v200
    %v222 = vpop.permute.xlu0 %221
    %v224 = vadd.f32 %v218, %v222
    %vm225 = vcmp.lt.f32.partialorder %v224, %v197
    %v226 = vsel %vm225, %v224, %v197
    %v227 = vsel %vm225, 6, %v198
    %v228 = vld [vmem:[%s1 + $0x38] sm:$0xff]
    %v229 = vld [vmem:[%s2 + $0x38] sm:$0xff]
    %231 = vset.pattern.permute.xlu0 0
    %232 = vperm.xlu0 %231, %v228
    %v233 = vpop.permute.xlu0 %232
    %v235 = vmul.f32 %v233, %v26
    %236 = vset.pattern.permute.xlu0 1
    %237 = vperm.xlu0 %236, %v228
    %v238 = vpop.permute.xlu0 %237
    %v240 = vmul.f32 %v238, %v35
    %v241 = vadd.f32 %v235, %v240
    %242 = vset.pattern.permute.xlu0 2
    %243 = vperm.xlu0 %242, %v228
    %v244 = vpop.permute.xlu0 %243
    %v246 = vmul.f32 %v244, %v45
    %v247 = vadd.f32 %v241, %v246
    %249 = vset.pattern.permute.xlu0 0
    %250 = vperm.xlu0 %249, %v229
    %v251 = vpop.permute.xlu0 %250
    %v253 = vadd.f32 %v247, %v251
    %vm254 = vcmp.lt.f32.partialorder %v253, %v226
    %v255 = vsel %vm254, %v253, %v226
    %v256 = vsel %vm254, 7, %v227
    %v257 = vld [vmem:[%s1 + $0x40] sm:$0xff]
    %v258 = vld [vmem:[%s2 + $0x40] sm:$0xff]
    %260 = vset.pattern.permute.xlu0 0
    %261 = vperm.xlu0 %260, %v257
    %v262 = vpop.permute.xlu0 %261
    %v264 = vmul.f32 %v262, %v26
    %265 = vset.pattern.permute.xlu0 1
    %266 = vperm.xlu0 %265, %v257
    %v267 = vpop.permute.xlu0 %266
    %v269 = vmul.f32 %v267, %v35
    %v270 = vadd.f32 %v264, %v269
    %271 = vset.pattern.permute.xlu0 2
    %272 = vperm.xlu0 %271, %v257
    %v273 = vpop.permute.xlu0 %272
    %v275 = vmul.f32 %v273, %v45
    %v276 = vadd.f32 %v270, %v275
    %278 = vset.pattern.permute.xlu0 0
    %279 = vperm.xlu0 %278, %v258
    %v280 = vpop.permute.xlu0 %279
    %v282 = vadd.f32 %v276, %v280
    %vm283 = vcmp.lt.f32.partialorder %v282, %v255
    %v284 = vsel %vm283, %v282, %v255
    %v285 = vsel %vm283, 8, %v256
    %v286 = vld [vmem:[%s1 + $0x48] sm:$0xff]
    %v287 = vld [vmem:[%s2 + $0x48] sm:$0xff]
    %289 = vset.pattern.permute.xlu0 0
    %290 = vperm.xlu0 %289, %v286
    %v291 = vpop.permute.xlu0 %290
    %v293 = vmul.f32 %v291, %v26
    %294 = vset.pattern.permute.xlu0 1
    %295 = vperm.xlu0 %294, %v286
    %v296 = vpop.permute.xlu0 %295
    %v298 = vmul.f32 %v296, %v35
    %v299 = vadd.f32 %v293, %v298
    %300 = vset.pattern.permute.xlu0 2
    %301 = vperm.xlu0 %300, %v286
    %v302 = vpop.permute.xlu0 %301
    %v304 = vmul.f32 %v302, %v45
    %v305 = vadd.f32 %v299, %v304
    %307 = vset.pattern.permute.xlu0 0
    %308 = vperm.xlu0 %307, %v287
    %v309 = vpop.permute.xlu0 %308
    %v311 = vadd.f32 %v305, %v309
    %vm312 = vcmp.lt.f32.partialorder %v311, %v284
    %v313 = vsel %vm312, %v311, %v284
    %v314 = vsel %vm312, 9, %v285
    %v315 = vld [vmem:[%s1 + $0x50] sm:$0xff]
    %v316 = vld [vmem:[%s2 + $0x50] sm:$0xff]
    %318 = vset.pattern.permute.xlu0 0
    %319 = vperm.xlu0 %318, %v315
    %v320 = vpop.permute.xlu0 %319
    %v322 = vmul.f32 %v320, %v26
    %323 = vset.pattern.permute.xlu0 1
    %324 = vperm.xlu0 %323, %v315
    %v325 = vpop.permute.xlu0 %324
    %v327 = vmul.f32 %v325, %v35
    %v328 = vadd.f32 %v322, %v327
    %329 = vset.pattern.permute.xlu0 2
    %330 = vperm.xlu0 %329, %v315
    %v331 = vpop.permute.xlu0 %330
    %v333 = vmul.f32 %v331, %v45
    %v334 = vadd.f32 %v328, %v333
    %336 = vset.pattern.permute.xlu0 0
    %337 = vperm.xlu0 %336, %v316
    %v338 = vpop.permute.xlu0 %337
    %v340 = vadd.f32 %v334, %v338
    %vm341 = vcmp.lt.f32.partialorder %v340, %v313
    %v342 = vsel %vm341, %v340, %v313
    %v343 = vsel %vm341, 10, %v314
    %v344 = vld [vmem:[%s1 + $0x58] sm:$0xff]
    %v345 = vld [vmem:[%s2 + $0x58] sm:$0xff]
    %347 = vset.pattern.permute.xlu0 0
    %348 = vperm.xlu0 %347, %v344
    %v349 = vpop.permute.xlu0 %348
    %v351 = vmul.f32 %v349, %v26
    %352 = vset.pattern.permute.xlu0 1
    %353 = vperm.xlu0 %352, %v344
    %v354 = vpop.permute.xlu0 %353
    %v356 = vmul.f32 %v354, %v35
    %v357 = vadd.f32 %v351, %v356
    %358 = vset.pattern.permute.xlu0 2
    %359 = vperm.xlu0 %358, %v344
    %v360 = vpop.permute.xlu0 %359
    %v362 = vmul.f32 %v360, %v45
    %v363 = vadd.f32 %v357, %v362
    %365 = vset.pattern.permute.xlu0 0
    %366 = vperm.xlu0 %365, %v345
    %v367 = vpop.permute.xlu0 %366
    %v369 = vadd.f32 %v363, %v367
    %vm370 = vcmp.lt.f32.partialorder %v369, %v342
    %v371 = vsel %vm370, %v369, %v342
    %v372 = vsel %vm370, 11, %v343
    %v373 = vld [vmem:[%s1 + $0x60] sm:$0xff]
    %v374 = vld [vmem:[%s2 + $0x60] sm:$0xff]
    %376 = vset.pattern.permute.xlu0 0
    %377 = vperm.xlu0 %376, %v373
    %v378 = vpop.permute.xlu0 %377
    %v380 = vmul.f32 %v378, %v26
    %381 = vset.pattern.permute.xlu0 1
    %382 = vperm.xlu0 %381, %v373
    %v383 = vpop.permute.xlu0 %382
    %v385 = vmul.f32 %v383, %v35
    %v386 = vadd.f32 %v380, %v385
    %387 = vset.pattern.permute.xlu0 2
    %388 = vperm.xlu0 %387, %v373
    %v389 = vpop.permute.xlu0 %388
    %v391 = vmul.f32 %v389, %v45
    %v392 = vadd.f32 %v386, %v391
    %394 = vset.pattern.permute.xlu0 0
    %395 = vperm.xlu0 %394, %v374
    %v396 = vpop.permute.xlu0 %395
    %v398 = vadd.f32 %v392, %v396
    %vm399 = vcmp.lt.f32.partialorder %v398, %v371
    %v400 = vsel %vm399, %v398, %v371
    %v401 = vsel %vm399, 12, %v372
    %v402 = vlaneseq
    %v403 = vshrl.u32 %v402, 7
    %v404 = vmul.u32 %v401, 8
    %v405 = vadd.s32 %v404, %v403
    %v406 = vrot.slane %v400, 4
    %v407 = vmin.f32 %v400, %v406
    %v408 = vrot.slane %v407, 2
    %v409 = vmin.f32 %v407, %v408
    %v410 = vrot.slane %v409, 1
    %v411 = vmin.f32 %v409, %v410
    %vm412 = vcmp.eq.f32.partialorder %v400, %v411
    %v413 = vsel %vm412, %v405, 104
    %v414 = vrot.slane %v413, 4
    %vm415 = vcmp.lt.s32.totalorder %v413, %v414
    %v416 = vsel %vm415, %v413, %v414
    %v417 = vrot.slane %v416, 2
    %vm418 = vcmp.lt.s32.totalorder %v416, %v417
    %v419 = vsel %vm418, %v416, %v417
    %v420 = vrot.slane %v419, 1
    %vm421 = vcmp.lt.s32.totalorder %v419, %v420
    %v422 = vsel %vm421, %v419, %v420
    %423 = vst [vmem:[#allocation2] sm:$0x1] %v422
    // Predicated region
    $region14: #{tpu_custom_call.1} parent=1 // pred_check
      _
    $region15: #{tpu_custom_call.1} parent=1 // pred_check_branch
      %425 = sbr.rel (0) target = $region17
    $region16: #{tpu_custom_call.1} parent=1 // pred_region
      %s427 = ssub.s32 16, 16
      %428 = vsyncadd [#allocation3], %s427
      %s430 = sshll.u32 [#allocation2], 4
      %s431 = int_to_ptr.vmem [resolvable:$true] %s430
      %433 = dma.vmem_to_hbm [thread:$0]  %s431, 16, %s3, [#allocation3]
    $region17: #{tpu_custom_call.1} parent=1 // pred_fallthru
      _
    // Predicated region
    $region18: #{tpu_custom_call.1} parent=1 // pred_check
      _
    $region19: #{tpu_custom_call.1} parent=1 // pred_check_branch
      %435 = sbr.rel (0) target = $region21
    $region20: #{tpu_custom_call.1} parent=1 // pred_region
      %436 = dma.done [#allocation3], 16
    $region21: #{tpu_custom_call.1} parent=1 // pred_fallthru
      _
    %437 = vsyncpa [#allocation3], 1

</llo_original>
